<compile_context>
chip_gen: v6e
topology: v6e:2x2x1
jax: 0.10.0
libtpu: 0.0.40
codegen_flags: <defaults>
</compile_context>

<pallas_src>
import functools

import jax
import jax.numpy as jnp
import numpy as np
from jax import lax
from jax.experimental import pallas as pl
from jax.experimental.pallas import tpu as pltpu


def _fused_kernel(p_ref, w_ref, prm_ref, o_ref, *, n_samples, m_per_sample, eps):
    # p_ref   : (KKC, N*M)  bf16  im2col patches (channel-major taps), lane-dense
    # w_ref   : (Cout, KKC) bf16  spatially-flipped ConvTranspose2d weights, same tap order
    # prm_ref : (Cout, 3)   f32   packed [conv bias | LN weight | LN bias]
    # o_ref   : (N, Cout, M) f32  normalized + ReLU'd output
    acc = jnp.dot(w_ref[...], p_ref[...],
                  preferred_element_type=jnp.float32)          # (Cout, N*M) on the MXU
    prm = prm_ref[...]
    bias, gamma, beta = prm[:, 0:1], prm[:, 1:2], prm[:, 2:3]  # (Cout, 1) columns
    acc = acc + bias                                           # conv bias (lane broadcast)

    # LayerNorm over all of (C, H, W) of each sample (== F.layer_norm(x, x.size()[1:])),
    # then per-channel affine + ReLU.  N and M are static Python ints and each
    # slice starts on a 128-lane boundary, so slicing costs no relayout.
    inv_n = 1.0 / float(acc.shape[0] * m_per_sample)
    for n in range(n_samples):                                 # static trip count
        sl = acc[:, n * m_per_sample:(n + 1) * m_per_sample]   # (Cout, M)
        mean = jnp.sum(sl) * inv_n
        d = sl - mean
        var = jnp.sum(d * d) * inv_n                           # two-pass, f32
        rstd = lax.rsqrt(var + eps)
        y = d * (rstd * gamma) + beta
        o_ref[n] = jnp.maximum(y, 0.0).astype(o_ref.dtype)     # ReLU, lane-dense store


def prepare_parameters(weight, bias, gamma, beta):
    """One-time (init / weight-update time) parameter prep, hoisted out of the
    jitted forward path.

    weight: (Cin, Cout, K, K)  (PyTorch ConvTranspose2d layout).
    Returns:
      w2     (Cout, Cin*K*K) bf16 -- spatially flipped, channel-major tap order
             matching lax.conv_general_dilated_patches' feature ordering.
      params (Cout, 3)       f32  -- packed [conv bias | LN weight | LN bias].
    """
    Cin, Cout, K, _ = weight.shape
    w_flip = jnp.flip(weight, axis=(2, 3))                     # (Cin, Cout, K, K)
    w2 = (jnp.transpose(w_flip, (1, 0, 2, 3))                  # (Cout, Cin, K, K)
          .reshape(Cout, Cin * K * K)
          .astype(jnp.bfloat16))
    params = jnp.stack([bias, gamma, beta], axis=1).astype(jnp.float32)  # (Cout, 3)
    return w2, params


def relu_ins_conv_transpose2d(x_nchw, w2, params, *, kernel_size, stride,
                              padding, output_padding, eps=1e-5):
    """Forward pass.  x_nchw: (N, Cin, H, W); w2/params from prepare_parameters()."""
    N, Cin, H, W = x_nchw.shape
    K = kernel_size
    Cout = w2.shape[0]
    KKC = Cin * K * K
    Hout = (H - 1) * stride - 2 * padding + K + output_padding
    Wout = (W - 1) * stride - 2 * padding + K + output_padding
    M = Hout * Wout
    ph = K - 1 - padding
    assert ph >= 0, "padding > kernel_size - 1 not supported"

    # ConvTranspose2d == stride-1 VALID correlation of the zero-dilated, padded
    # input with the spatially flipped kernel.  The whole im2col (dilate + pad +
    # patch extraction), including collapsing the batch into the lane dim, is a
    # SINGLE XLA op; "CNHW" output layout makes the reshape to (KKC, N*M) free.
    patches = lax.conv_general_dilated_patches(
        x_nchw.astype(jnp.bfloat16),
        filter_shape=(K, K),
        window_strides=(1, 1),
        padding=[(ph, ph + output_padding), (ph, ph + output_padding)],
        lhs_dilation=(stride, stride),
        dimension_numbers=("NCHW", "OIHW", "CNHW"),
    )                                                 # (Cin*K*K, N, Hout, Wout) bf16
    patches = patches.reshape(KKC, N * M)             # free reshape, lane-dense (512)

    kernel = functools.partial(_fused_kernel, n_samples=N, m_per_sample=M, eps=eps)
    out = pl.pallas_call(
        kernel,
        out_shape=jax.ShapeDtypeStruct((N, Cout, M), jnp.float32),
        # No grid: everything is resident (~0.15 MiB of VMEM) and the whole
        # batch is one MXU GEMM -> zero per-grid-step overhead on v5e/v6e.
        in_specs=[
            pl.BlockSpec(memory_space=pltpu.MemorySpace.VMEM),   # patches (KKC, N*M)
            pl.BlockSpec(memory_space=pltpu.MemorySpace.VMEM),   # w2 (Cout, KKC)
            pl.BlockSpec(memory_space=pltpu.MemorySpace.VMEM),   # params (Cout, 3)
        ],
        out_specs=pl.BlockSpec(memory_space=pltpu.MemorySpace.VMEM),
    )(patches, w2, params)

    # (N, Cout, Hout*Wout) -> NCHW is a pure reshape: no transpose needed.
    return out.reshape(N, Cout, Hout, Wout)


def _reference(x_nchw, weight, bias, gamma, beta, *, stride, padding, output_padding, eps=1e-5):
    """Pure-JAX/XLA reference for the same forward pass (sanity check)."""
    N, Cin, H, W = x_nchw.shape
    K = weight.shape[2]
    Cout = weight.shape[1]
    x = jnp.transpose(x_nchw, (0, 2, 3, 1)).astype(jnp.float32)
    w_hwio = jnp.transpose(jnp.flip(weight, (2, 3)), (2, 3, 0, 1)).astype(jnp.float32)
    p = K - 1 - padding
    y = lax.conv_general_dilated(
        x, w_hwio, window_strides=(1, 1),
        padding=[(p, p + output_padding), (p, p + output_padding)],
        lhs_dilation=(stride, stride),
        dimension_numbers=("NHWC", "HWIO", "NHWC"),
        precision=lax.Precision.HIGHEST)
    y = y + bias.reshape(1, 1, 1, Cout)
    mean = jnp.mean(y, axis=(1, 2, 3), keepdims=True)
    var = jnp.mean((y - mean) ** 2, axis=(1, 2, 3), keepdims=True)
    y = (y - mean) / jnp.sqrt(var + eps)
    y = y * gamma.reshape(1, 1, 1, Cout) + beta.reshape(1, 1, 1, Cout)
    y = jnp.maximum(y, 0.0)
    return jnp.transpose(y, (0, 3, 1, 2))


if __name__ == "__main__":
    key = jax.random.PRNGKey(0)
    N, n_in, n_out = 2, 8, 16
    H = W = 8
    kernel_size, stride, padding, output_padding = 3, 2, 1, 1   # -> 16x16 output (M=256)

    kx, kw, kb = jax.random.split(key, 3)
    x = jax.random.normal(kx, (N, n_in, H, W), jnp.float32)

    # gaussian_weights_init -> ConvTranspose2d weight ~ N(0, 0.02); bias keeps the
    # default small-uniform init; LayerNorm affine weight=1, bias=0 (per channel).
    weight = 0.02 * jax.random.normal(kw, (n_in, n_out, kernel_size, kernel_size), jnp.float32)
    bound = 1.0 / np.sqrt(n_out * kernel_size * kernel_size)
    bias = jax.random.uniform(kb, (n_out,), jnp.float32, -bound, bound)
    gamma = jnp.ones((n_out,), jnp.float32)
    beta = jnp.zeros((n_out,), jnp.float32)

    # One-time parameter prep (hoisted out of the per-call forward path).
    w2, params = prepare_parameters(weight, bias, gamma, beta)

    fwd = jax.jit(functools.partial(
        relu_ins_conv_transpose2d,
        kernel_size=kernel_size, stride=stride,
        padding=padding, output_padding=output_padding))
    out = jax.block_until_ready(fwd(x, w2, params))

    ref = _reference(
        x, weight, bias, gamma, beta,
        stride=stride, padding=padding, output_padding=output_padding)
    np.testing.assert_allclose(np.asarray(out), np.asarray(ref), atol=3e-2, rtol=3e-2)

    print("KERNEL_OK")
</pallas_src>

<mosaic_0001>
module attributes {stable_mosaic.version = 11 : i64} {
  func.func @_fused_kernel(%arg0: memref<72x512xbf16, #tpu.memory_space<vmem>>, %arg1: memref<16x72xbf16, #tpu.memory_space<vmem>>, %arg2: memref<16x3xf32, #tpu.memory_space<vmem>>, %arg3: memref<2x16x256xf32, #tpu.memory_space<vmem>>) attributes {dimension_semantics = [], scalar_prefetch = 0 : i64, scratch_operands = 0 : i64, tpu.core_type = #tpu.core_type<tc>} {
    %c0 = arith.constant 0 : index
    %c0_0 = arith.constant 0 : index
    %0 = vector.load %arg1[%c0, %c0_0] : memref<16x72xbf16, #tpu.memory_space<vmem>>, vector<16x72xbf16>
    %c0_1 = arith.constant 0 : index
    %c0_2 = arith.constant 0 : index
    %1 = vector.load %arg0[%c0_1, %c0_2] : memref<72x512xbf16, #tpu.memory_space<vmem>>, vector<72x512xbf16>
    %cst = arith.constant dense<0.000000e+00> : vector<16x512xf32>
    %2 = tpu.matmul %0, %1, %cst {dimension_numbers = #tpu.dot_dimension_numbers<[1], [0], [0], [1], [0, 0, 1, 1], [], []>} : vector<16x72xbf16>, vector<72x512xbf16>, vector<16x512xf32> -> vector<16x512xf32>
    %c0_3 = arith.constant 0 : index
    %c0_4 = arith.constant 0 : index
    %3 = vector.load %arg2[%c0_3, %c0_4] : memref<16x3xf32, #tpu.memory_space<vmem>>, vector<16x3xf32>
    %4 = vector.extract_strided_slice %3 {offsets = [0, 0], sizes = [16, 1], strides = [1, 1]} : vector<16x3xf32> to vector<16x1xf32>
    %5 = vector.extract_strided_slice %3 {offsets = [0, 1], sizes = [16, 1], strides = [1, 1]} : vector<16x3xf32> to vector<16x1xf32>
    %6 = vector.extract_strided_slice %3 {offsets = [0, 2], sizes = [16, 1], strides = [1, 1]} : vector<16x3xf32> to vector<16x1xf32>
    %7 = vector.broadcast %4 : vector<16x1xf32> to vector<16x512xf32>
    %8 = arith.addf %2, %7 : vector<16x512xf32>
    %9 = vector.extract_strided_slice %8 {offsets = [0, 0], sizes = [16, 256], strides = [1, 1]} : vector<16x512xf32> to vector<16x256xf32>
    %10 = vector.shape_cast %9 : vector<16x256xf32> to vector<1x16x256xf32>
    %cst_5 = arith.constant dense<0.000000e+00> : vector<1xf32>
    %11 = vector.multi_reduction <add>, %10, %cst_5 [1, 2] : vector<1x16x256xf32> to vector<1xf32>
    %12 = vector.shape_cast %11 : vector<1xf32> to vector<1x1x1xf32>
    %13 = vector.extract %12[0, 0, 0] : f32 from vector<1x1x1xf32>
    %cst_6 = arith.constant 2.44140625E-4 : f32
    %14 = arith.mulf %13, %cst_6 : f32
    %15 = vector.broadcast %14 : f32 to vector<16x256xf32>
    %16 = arith.subf %9, %15 : vector<16x256xf32>
    %17 = arith.mulf %16, %16 : vector<16x256xf32>
    %18 = vector.shape_cast %17 : vector<16x256xf32> to vector<1x16x256xf32>
    %cst_7 = arith.constant dense<0.000000e+00> : vector<1xf32>
    %19 = vector.multi_reduction <add>, %18, %cst_7 [1, 2] : vector<1x16x256xf32> to vector<1xf32>
    %20 = vector.shape_cast %19 : vector<1xf32> to vector<1x1x1xf32>
    %21 = vector.extract %20[0, 0, 0] : f32 from vector<1x1x1xf32>
    %cst_8 = arith.constant 2.44140625E-4 : f32
    %22 = arith.mulf %21, %cst_8 : f32
    %cst_9 = arith.constant 9.99999974E-6 : f32
    %23 = arith.addf %22, %cst_9 : f32
    %24 = math.rsqrt %23 : f32
    %25 = vector.broadcast %24 : f32 to vector<16x1xf32>
    %26 = arith.mulf %25, %5 : vector<16x1xf32>
    %27 = vector.broadcast %26 : vector<16x1xf32> to vector<16x256xf32>
    %28 = arith.mulf %16, %27 : vector<16x256xf32>
    %29 = vector.broadcast %6 : vector<16x1xf32> to vector<16x256xf32>
    %30 = arith.addf %28, %29 : vector<16x256xf32>
    %cst_10 = arith.constant 0.000000e+00 : f32
    %31 = vector.broadcast %cst_10 : f32 to vector<16x256xf32>
    %32 = arith.maximumf %30, %31 : vector<16x256xf32>
    %c0_11 = arith.constant 0 : index
    %c0_12 = arith.constant 0 : index
    %c0_13 = arith.constant 0 : index
    %33 = vector.load %arg3[%c0_11, %c0_12, %c0_13] : memref<2x16x256xf32, #tpu.memory_space<vmem>>, vector<1x16x256xf32>
    %34 = vector.shape_cast %33 : vector<1x16x256xf32> to vector<16x256xf32>
    %35 = vector.shape_cast %32 : vector<16x256xf32> to vector<1x16x256xf32>
    tpu.vector_store %arg3[%c0_11, %c0_12, %c0_13], %35 {strides = array<i32>} : memref<2x16x256xf32, #tpu.memory_space<vmem>>, vector<1x16x256xf32>,
    %36 = vector.extract_strided_slice %8 {offsets = [0, 256], sizes = [16, 256], strides = [1, 1]} : vector<16x512xf32> to vector<16x256xf32>
    %37 = vector.shape_cast %36 : vector<16x256xf32> to vector<1x16x256xf32>
    %cst_14 = arith.constant dense<0.000000e+00> : vector<1xf32>
    %38 = vector.multi_reduction <add>, %37, %cst_14 [1, 2] : vector<1x16x256xf32> to vector<1xf32>
    %39 = vector.shape_cast %38 : vector<1xf32> to vector<1x1x1xf32>
    %40 = vector.extract %39[0, 0, 0] : f32 from vector<1x1x1xf32>
    %cst_15 = arith.constant 2.44140625E-4 : f32
    %41 = arith.mulf %40, %cst_15 : f32
    %42 = vector.broadcast %41 : f32 to vector<16x256xf32>
    %43 = arith.subf %36, %42 : vector<16x256xf32>
    %44 = arith.mulf %43, %43 : vector<16x256xf32>
    %45 = vector.shape_cast %44 : vector<16x256xf32> to vector<1x16x256xf32>
    %cst_16 = arith.constant dense<0.000000e+00> : vector<1xf32>
    %46 = vector.multi_reduction <add>, %45, %cst_16 [1, 2] : vector<1x16x256xf32> to vector<1xf32>
    %47 = vector.shape_cast %46 : vector<1xf32> to vector<1x1x1xf32>
    %48 = vector.extract %47[0, 0, 0] : f32 from vector<1x1x1xf32>
    %cst_17 = arith.constant 2.44140625E-4 : f32
    %49 = arith.mulf %48, %cst_17 : f32
    %cst_18 = arith.constant 9.99999974E-6 : f32
    %50 = arith.addf %49, %cst_18 : f32
    %51 = math.rsqrt %50 : f32
    %52 = vector.broadcast %51 : f32 to vector<16x1xf32>
    %53 = arith.mulf %52, %5 : vector<16x1xf32>
    %54 = vector.broadcast %53 : vector<16x1xf32> to vector<16x256xf32>
    %55 = arith.mulf %43, %54 : vector<16x256xf32>
    %56 = vector.broadcast %6 : vector<16x1xf32> to vector<16x256xf32>
    %57 = arith.addf %55, %56 : vector<16x256xf32>
    %cst_19 = arith.constant 0.000000e+00 : f32
    %58 = vector.broadcast %cst_19 : f32 to vector<16x256xf32>
    %59 = arith.maximumf %57, %58 : vector<16x256xf32>
    %c1 = arith.constant 1 : index
    %c0_20 = arith.constant 0 : index
    %c0_21 = arith.constant 0 : index
    %60 = vector.load %arg3[%c1, %c0_20, %c0_21] : memref<2x16x256xf32, #tpu.memory_space<vmem>>, vector<1x16x256xf32>
    %61 = vector.shape_cast %60 : vector<1x16x256xf32> to vector<16x256xf32>
    %62 = vector.shape_cast %59 : vector<16x256xf32> to vector<1x16x256xf32>
    tpu.vector_store %arg3[%c1, %c0_20, %c0_21], %62 {strides = array<i32>} : memref<2x16x256xf32, #tpu.memory_space<vmem>>, vector<1x16x256xf32>,
    return
  }
}

</mosaic_0001>

<llo_original>
// kernel: relu_ins_conv_transpose2d.1
$region0: #{relu_ins_conv_transpose2d.1}
  #allocation0 [shape = 'u32[]', space=smem, size = 0x4, offset = 0x4, fixed_abs, tag = 'smem constant byte address 0x4 - core index']
  #allocation1 [shape = 'u32[144,128]{1,0:T(1,128)}', space=vmem, size = 0x12000, scoped, tag = 'internal scratch']
  %s0 = inlined_call_operand.vmem [shape: bf16[72,512], index: 0, kind: input, shape index: {}]
  %s1 = inlined_call_operand.vmem [shape: bf16[16,72], index: 1, kind: input, shape index: {}]
  %s2 = inlined_call_operand.vmem [shape: f32[16,3], index: 2, kind: input, shape index: {}]
  %s3 = inlined_call_operand.vmem [shape: f32[2,16,256], index: 3, kind: output, shape index: {}]
  %s4 = sld [smem:[#allocation0]]
  $region22: #{relu_ins_conv_transpose2d.1} parent=0
    _
  %s6 = ssub.s32 1, %s4
  %s7 = scalar_select 0, %s6, %s4
  // Predicated region
  $region2: #{relu_ins_conv_transpose2d.1} parent=0 // pred_check
    _
  $region3: #{relu_ins_conv_transpose2d.1} parent=0 // pred_check_branch
    %9 = sbr.rel (0) target = $region5
  $region4: #{relu_ins_conv_transpose2d.1} parent=0 // pred_region
    _
  $region5: #{relu_ins_conv_transpose2d.1} parent=0 // pred_fallthru
    _
  // Predicated region
  $region6: #{relu_ins_conv_transpose2d.1} parent=0 // pred_check
    _
  $region7: #{relu_ins_conv_transpose2d.1} parent=0 // pred_check_branch
    %11 = sbr.rel (0) target = $region9
  $region8: #{relu_ins_conv_transpose2d.1} parent=0 // pred_region
    _
  $region9: #{relu_ins_conv_transpose2d.1} parent=0 // pred_fallthru
    _
  // Predicated region
  $region10: #{relu_ins_conv_transpose2d.1} parent=0 // pred_check
    _
  $region11: #{relu_ins_conv_transpose2d.1} parent=0 // pred_check_branch
    %13 = sbr.rel (0) target = $region13
  $region12: #{relu_ins_conv_transpose2d.1} parent=0 // pred_region
    _
  $region13: #{relu_ins_conv_transpose2d.1} parent=0 // pred_fallthru
    _
  %v15 = vld [vmem:[%s1] sm:$0xf]
  %v16 = vld [vmem:[%s1 + $0x4] sm:$0xf]
  %v17 = vld [vmem:[%s0] sm:$0xff]
  %v18 = vld [vmem:[%s0 + $0x8] sm:$0xff]
  %v19 = vld [vmem:[%s0 + $0x10] sm:$0xff]
  %v20 = vld [vmem:[%s0 + $0x18] sm:$0xff]
  %v21 = vld [vmem:[%s0 + $0x20] sm:$0xff]
  %v22 = vld [vmem:[%s0 + $0x28] sm:$0xff]
  %v23 = vld [vmem:[%s0 + $0x30] sm:$0xff]
  %v24 = vld [vmem:[%s0 + $0x38] sm:$0xff]
  %v25 = vld [vmem:[%s0 + $0x40] sm:$0xff]
  %v26 = vld [vmem:[%s0 + $0x48] sm:$0xff]
  %v27 = vld [vmem:[%s0 + $0x50] sm:$0xff]
  %v28 = vld [vmem:[%s0 + $0x58] sm:$0xff]
  %v29 = vld [vmem:[%s0 + $0x60] sm:$0xff]
  %v30 = vld [vmem:[%s0 + $0x68] sm:$0xff]
  %v31 = vld [vmem:[%s0 + $0x70] sm:$0xff]
  %v32 = vld [vmem:[%s0 + $0x78] sm:$0xff]
  %v33 = vld [vmem:[%s0 + $0x80] sm:$0xff]
  %v34 = vld [vmem:[%s0 + $0x88] sm:$0xff]
  %v35 = vld [vmem:[%s2] sm:$0xff]
  %v36 = vld [vmem:[%s2 + $0x8] sm:$0xff]
  %38 = vset.pattern.permute.xlu0 0
  %39 = vperm.xlu0 %38, %v35
  %v40 = vpop.permute.xlu0 %39
  %43 = vset.pattern.permute.xlu0 0
  %44 = vperm.xlu0 %43, %v36
  %v45 = vpop.permute.xlu0 %44
  %v49 = vunpack.c.l.b16 %v15
  %v50 = vunpack.c.l.b16 %v16
  %v51 = vpack.c.b16 %v50, %v49
  %v70 = vunpack.c.l.b16 %v17
  %v71 = vunpack.c.h.b16 %v17
  %v72 = vunpack.c.l.b16 %v18
  %v73 = vunpack.c.h.b16 %v18
  %v74 = vunpack.c.l.b16 %v19
  %v75 = vunpack.c.h.b16 %v19
  %v76 = vunpack.c.l.b16 %v20
  %v77 = vunpack.c.h.b16 %v20
  %v78 = vunpack.c.l.b16 %v21
  %v79 = vunpack.c.h.b16 %v21
  %v80 = vunpack.c.l.b16 %v22
  %v81 = vunpack.c.h.b16 %v22
  %v82 = vunpack.c.l.b16 %v23
  %v83 = vunpack.c.h.b16 %v23
  %v84 = vunpack.c.l.b16 %v24
  %v85 = vunpack.c.h.b16 %v24
  %v86 = vunpack.c.l.b16 %v25
  %v87 = vunpack.c.h.b16 %v25
  %v88 = vunpack.c.l.b16 %v26
  %v89 = vunpack.c.h.b16 %v26
  %v90 = vunpack.c.l.b16 %v27
  %v91 = vunpack.c.h.b16 %v27
  %v92 = vunpack.c.l.b16 %v28
  %v93 = vunpack.c.h.b16 %v28
  %v94 = vunpack.c.l.b16 %v29
  %v95 = vunpack.c.h.b16 %v29
  %v96 = vunpack.c.l.b16 %v30
  %v97 = vunpack.c.h.b16 %v30
  %v98 = vunpack.c.l.b16 %v31
  %v99 = vunpack.c.h.b16 %v31
  %v100 = vunpack.c.l.b16 %v32
  %v101 = vunpack.c.h.b16 %v32
  %v102 = vunpack.c.l.b16 %v33
  %v103 = vunpack.c.h.b16 %v33
  %v104 = vunpack.c.l.b16 %v34
  %v105 = vunpack.c.h.b16 %v34
  %v106 = vpack.c.b16 %v74, %v70
  %v107 = vpack.c.b16 %v75, %v71
  %v108 = vpack.c.b16 %v76, %v72
  %v109 = vpack.c.b16 %v77, %v73
  %v110 = vpack.c.b16 %v82, %v78
  %v111 = vpack.c.b16 %v83, %v79
  %v112 = vpack.c.b16 %v84, %v80
  %v113 = vpack.c.b16 %v85, %v81
  %v114 = vpack.c.b16 %v90, %v86
  %v115 = vpack.c.b16 %v91, %v87
  %v116 = vpack.c.b16 %v92, %v88
  %v117 = vpack.c.b16 %v93, %v89
  %v118 = vpack.c.b16 %v98, %v94
  %v119 = vpack.c.b16 %v99, %v95
  %v120 = vpack.c.b16 %v100, %v96
  %v121 = vpack.c.b16 %v101, %v97
  %v122 = vpack.c.b16 %v102, %v102
  %v123 = vpack.c.b16 %v103, %v103
  %v124 = vpack.c.b16 %v104, %v104
  %v125 = vpack.c.b16 %v105, %v105
  %vm142 = vcmask 588800
  %v144 = vsel %vm142, %v51, 0
  %vm146 = vcmask 1043456
  %v148 = vsel %vm146, %v122, 0
  %v151 = vsel %vm146, %v123, 0
  %v154 = vsel %vm146, %v124, 0
  %v157 = vsel %vm146, %v125, 0
  %159 = vmatprep.subr.bf16.mxu0 0
  %160 = vmatpush1.bf16.msra.mxu0 0
  %161 = vmatprep.subr.bf16.mxu0 0
  %162 = vmatpush1.bf16.msra.mxu0 0
  %163 = vmatprep.subr.bf16.mxu0 0
  %164 = vmatpush1.bf16.msra.mxu0 0
  %165 = vmatprep.subr.bf16.mxu0 %v151
  %166 = vmatpush1.bf16.msra.mxu0 %v148
  %167 = vmatprep.subr.bf16.mxu0 %v119
  %168 = vmatpush1.bf16.msra.mxu0 %v118
  %169 = vmatprep.subr.bf16.mxu0 %v115
  %170 = vmatpush1.bf16.msra.mxu0 %v114
  %171 = vmatprep.subr.bf16.mxu0 %v111
  %172 = vmatpush1.bf16.msra.mxu0 %v110
  %173 = vmatprep.subr.bf16.mxu0 %v107
  %174 = vmatpush1.bf16.msra.mxu0 %v106
  %175 = vmatprep.subr.bf16.mxu0 0
  %176 = vmatpush2.bf16.msra.mxu0 0
  %177 = vmatprep.subr.bf16.mxu0 0
  %178 = vmatpush2.bf16.msra.mxu0 0
  %179 = vmatprep.subr.bf16.mxu0 0
  %180 = vmatpush2.bf16.msra.mxu0 0
  %181 = vmatprep.subr.bf16.mxu0 0
  %182 = vmatpush2.bf16.msra.mxu0 0
  %183 = vmatprep.subr.bf16.mxu0 0
  %184 = vmatpush2.bf16.msra.mxu0 0
  %185 = vmatprep.subr.bf16.mxu0 0
  %186 = vmatpush2.bf16.msra.mxu0 0
  %187 = vmatprep.subr.bf16.mxu0 0
  %188 = vmatpush2.bf16.msra.mxu0 0
  %189 = vmatprep.subr.bf16.mxu0 0
  %190 = vmatpush2.bf16.msra.mxu0 0
  %191 = vmatprep.mubr.bf16.mxu0 0
  %192 = vmatmul.mubr.bf16.gmra.mxu0 %v144
  %v193 = vpop.f32.mrf.mxu0
  %v194 = vadd.f32 %v40, %v193
  %v195 = vpop.f32.mrf.mxu0
  %v196 = vadd.f32 %v40, %v195
  %v197 = vpop.f32.mrf.mxu0
  %v198 = vadd.f32 %v45, %v197
  %v199 = vpop.f32.mrf.mxu0
  %v200 = vadd.f32 %v45, %v199
  %201 = vdwg.mxu0
  %202 = vmatprep.subr.bf16.mxu0 0
  %203 = vmatpush1.bf16.msra.mxu0 0
  %204 = vmatprep.subr.bf16.mxu0 0
  %205 = vmatpush1.bf16.msra.mxu0 0
  %206 = vmatprep.subr.bf16.mxu0 0
  %207 = vmatpush1.bf16.msra.mxu0 0
  %208 = vmatprep.subr.bf16.mxu0 %v157
  %209 = vmatpush1.bf16.msra.mxu0 %v154
  %210 = vmatprep.subr.bf16.mxu0 %v121
  %211 = vmatpush1.bf16.msra.mxu0 %v120
  %212 = vmatprep.subr.bf16.mxu0 %v117
  %213 = vmatpush1.bf16.msra.mxu0 %v116
  %214 = vmatprep.subr.bf16.mxu0 %v113
  %215 = vmatpush1.bf16.msra.mxu0 %v112
  %216 = vmatprep.subr.bf16.mxu0 %v109
  %217 = vmatpush1.bf16.msra.mxu0 %v108
  %218 = vmatprep.subr.bf16.mxu0 0
  %219 = vmatpush2.bf16.msra.mxu0 0
  %220 = vmatprep.subr.bf16.mxu0 0
  %221 = vmatpush2.bf16.msra.mxu0 0
  %222 = vmatprep.subr.bf16.mxu0 0
  %223 = vmatpush2.bf16.msra.mxu0 0
  %224 = vmatprep.subr.bf16.mxu0 0
  %225 = vmatpush2.bf16.msra.mxu0 0
  %226 = vmatprep.subr.bf16.mxu0 0
  %227 = vmatpush2.bf16.msra.mxu0 0
  %228 = vmatprep.subr.bf16.mxu0 0
  %229 = vmatpush2.bf16.msra.mxu0 0
  %230 = vmatprep.subr.bf16.mxu0 0
  %231 = vmatpush2.bf16.msra.mxu0 0
  %232 = vmatprep.subr.bf16.mxu0 0
  %233 = vmatpush2.bf16.msra.mxu0 0
  %234 = vmatprep.mubr.bf16.mxu0 0
  %235 = vmatmul.mubr.bf16.gmra.mxu0 %v144
  %v236 = vpop.f32.mrf.mxu0
  %v237 = vadd.f32 %v40, %v236
  %v238 = vpop.f32.mrf.mxu0
  %v239 = vadd.f32 %v40, %v238
  %v240 = vpop.f32.mrf.mxu0
  %v241 = vadd.f32 %v45, %v240
  %v242 = vpop.f32.mrf.mxu0
  %v243 = vadd.f32 %v45, %v242
  %244 = vdwg.mxu0
  %v245 = vadd.f32 %v194, %v196
  %v246 = vadd.f32 %v245, %v198
  %v247 = vadd.f32 %v246, %v200
  %248 = vadd.xlane.f32.xlu0 %v247
  %v249 = vpop.xlane.xlu0 %248
  %v250 = vrot.slane %v249, 4
  %v251 = vadd.f32 %v249, %v250
  %v252 = vrot.slane %v251, 2
  %v253 = vadd.f32 %v251, %v252
  %v254 = vrot.slane %v253, 1
  %v255 = vadd.f32 %v253, %v254
  %s256 = vtos %v255
  %s257 = smul.f32 %s256, 0.00024414063
  %v258 = vstv %s257
  %v259 = vsub.f32 %v194, %v258
  %v260 = vsub.f32 %v196, %v258
  %v261 = vsub.f32 %v198, %v258
  %v262 = vsub.f32 %v200, %v258
  %v263 = vmul.f32 %v259, %v259
  %v264 = vmul.f32 %v260, %v260
  %v265 = vmul.f32 %v261, %v261
  %v266 = vmul.f32 %v262, %v262
  %v267 = vadd.f32 %v263, %v264
  %v268 = vadd.f32 %v267, %v265
  %v269 = vadd.f32 %v268, %v266
  %270 = vadd.xlane.f32.xlu0 %v269
  %v271 = vpop.xlane.xlu0 %270
  %v272 = vrot.slane %v271, 4
  %v273 = vadd.f32 %v271, %v272
  %v274 = vrot.slane %v273, 2
  %v275 = vadd.f32 %v273, %v274
  %v276 = vrot.slane %v275, 1
  %v277 = vadd.f32 %v275, %v276
  %s278 = vtos %v277
  %s279 = smul.f32 %s278, 0.00024414063
  %s280 = sadd.f32 %s279, 1e-05
  %v281 = vstv %s280
  %v282 = vrsqrt.pop %v281
  %s283 = vtos %v282
  %v284 = vstv %s283
  %v285 = vmul.f32 %v284, %v35
  %v286 = vmul.f32 %v284, %v36
  %288 = vset.pattern.permute.xlu0 1
  %289 = vperm.xlu0 %288, %v285
  %v290 = vpop.permute.xlu0 %289
  %293 = vset.pattern.permute.xlu0 1
  %294 = vperm.xlu0 %293, %v286
  %v295 = vpop.permute.xlu0 %294
  %v297 = vmul.f32 %v259, %v290
  %v298 = vmul.f32 %v260, %v290
  %v299 = vmul.f32 %v261, %v295
  %v300 = vmul.f32 %v262, %v295
  %301 = vset.pattern.permute.xlu0 2
  %302 = vperm.xlu0 %301, %v35
  %v303 = vpop.permute.xlu0 %302
  %305 = vset.pattern.permute.xlu0 2
  %306 = vperm.xlu0 %305, %v36
  %v307 = vpop.permute.xlu0 %306
  %v309 = vadd.f32 %v297, %v303
  %v310 = vadd.f32 %v298, %v303
  %v311 = vadd.f32 %v299, %v307
  %v312 = vadd.f32 %v300, %v307
  %v313 = vmax.f32 %v309, 0.0
  %v314 = vmax.f32 %v310, 0.0
  %v315 = vmax.f32 %v311, 0.0
  %v316 = vmax.f32 %v312, 0.0
  %317 = vst [vmem:[%s3] sm:$0xff] %v313
  %318 = vst [vmem:[%s3 + $0x8] sm:$0xff] %v314
  %319 = vst [vmem:[%s3 + $0x10] sm:$0xff] %v315
  %320 = vst [vmem:[%s3 + $0x18] sm:$0xff] %v316
  %v321 = vadd.f32 %v237, %v239
  %v322 = vadd.f32 %v321, %v241
  %v323 = vadd.f32 %v322, %v243
  %324 = vadd.xlane.f32.xlu0 %v323
  %v325 = vpop.xlane.xlu0 %324
  %v326 = vrot.slane %v325, 4
  %v327 = vadd.f32 %v325, %v326
  %v328 = vrot.slane %v327, 2
  %v329 = vadd.f32 %v327, %v328
  %v330 = vrot.slane %v329, 1
  %v331 = vadd.f32 %v329, %v330
  %s332 = vtos %v331
  %s333 = smul.f32 %s332, 0.00024414063
  %v334 = vstv %s333
  %v335 = vsub.f32 %v237, %v334
  %v336 = vsub.f32 %v239, %v334
  %v337 = vsub.f32 %v241, %v334
  %v338 = vsub.f32 %v243, %v334
  %v339 = vmul.f32 %v335, %v335
  %v340 = vmul.f32 %v336, %v336
  %v341 = vmul.f32 %v337, %v337
  %v342 = vmul.f32 %v338, %v338
  %v343 = vadd.f32 %v339, %v340
  %v344 = vadd.f32 %v343, %v341
  %v345 = vadd.f32 %v344, %v342
  %346 = vadd.xlane.f32.xlu0 %v345
  %v347 = vpop.xlane.xlu0 %346
  %v348 = vrot.slane %v347, 4
  %v349 = vadd.f32 %v347, %v348
  %v350 = vrot.slane %v349, 2
  %v351 = vadd.f32 %v349, %v350
  %v352 = vrot.slane %v351, 1
  %v353 = vadd.f32 %v351, %v352
  %s354 = vtos %v353
  %s355 = smul.f32 %s354, 0.00024414063
  %s356 = sadd.f32 %s355, 1e-05
  %v357 = vstv %s356
  %v358 = vrsqrt.pop %v357
  %s359 = vtos %v358
  %v360 = vstv %s359
  %v361 = vmul.f32 %v360, %v35
  %v362 = vmul.f32 %v360, %v36
  %364 = vset.pattern.permute.xlu0 1
  %365 = vperm.xlu0 %364, %v361
  %v366 = vpop.permute.xlu0 %365
  %369 = vset.pattern.permute.xlu0 1
  %370 = vperm.xlu0 %369, %v362
  %v371 = vpop.permute.xlu0 %370
  %v373 = vmul.f32 %v335, %v366
  %v374 = vmul.f32 %v336, %v366
  %v375 = vmul.f32 %v337, %v371
  %v376 = vmul.f32 %v338, %v371
  %v377 = vadd.f32 %v373, %v303
  %v378 = vadd.f32 %v374, %v303
  %v379 = vadd.f32 %v375, %v307
  %v380 = vadd.f32 %v376, %v307
  %v381 = vmax.f32 %v377, 0.0
  %v382 = vmax.f32 %v378, 0.0
  %v383 = vmax.f32 %v379, 0.0
  %v384 = vmax.f32 %v380, 0.0
  %s385 = scalar_lea.vmem %s3, 32
  %386 = vst [vmem:[%s385] sm:$0xff] %v381
  %387 = vst [vmem:[%s385 + $0x8] sm:$0xff] %v382
  %388 = vst [vmem:[%s385 + $0x10] sm:$0xff] %v383
  %389 = vst [vmem:[%s385 + $0x18] sm:$0xff] %v384
  // Predicated region
  $region14: #{relu_ins_conv_transpose2d.1} parent=0 // pred_check
    _
  $region15: #{relu_ins_conv_transpose2d.1} parent=0 // pred_check_branch
    %391 = sbr.rel (0) target = $region17
  $region16: #{relu_ins_conv_transpose2d.1} parent=0 // pred_region
    _
  $region17: #{relu_ins_conv_transpose2d.1} parent=0 // pred_fallthru
    _
  // Predicated region
  $region18: #{relu_ins_conv_transpose2d.1} parent=0 // pred_check
    _
  $region19: #{relu_ins_conv_transpose2d.1} parent=0 // pred_check_branch
    %393 = sbr.rel (0) target = $region21
  $region20: #{relu_ins_conv_transpose2d.1} parent=0 // pred_region
    _
  $region21: #{relu_ins_conv_transpose2d.1} parent=0 // pred_fallthru
    _

</llo_original>
